<compile_context>
chip_gen: v6e
topology: v6e:2x2x1
jax: 0.10.0
libtpu: 0.0.40
codegen_flags: <defaults>
</compile_context>

<pallas_src>
import jax
import jax.numpy as jnp
from jax.experimental import pallas as pl
from jax.experimental.pallas import tpu as pltpu

H1, H2 = 256, 512  # hidden sizes from the PyTorch module


def _mlp_kernel(x_ref, w1_ref, b1_ref, w2_ref, b2_ref, w3_ref, b3_ref, o_ref):
    # In-kernel bf16 cast of the activations (VPU work, hidden under the MXU).
    x = x_ref[...].astype(jnp.bfloat16)
    # fc1 + ReLU  (bf16 MXU inputs, f32 accumulate / bias / ReLU)
    h1 = jnp.dot(x, w1_ref[...], preferred_element_type=jnp.float32)
    h1 = jnp.maximum(h1 + b1_ref[...], 0.0).astype(jnp.bfloat16)
    # fc2 + ReLU  (FLOP-dominant layer)
    h2 = jnp.dot(h1, w2_ref[...], preferred_element_type=jnp.float32)
    h2 = jnp.maximum(h2 + b2_ref[...], 0.0).astype(jnp.bfloat16)
    # out (no activation); unpadded last dim -> minimal HBM writeback
    o_ref[...] = (
        jnp.dot(h2, w3_ref[...], preferred_element_type=jnp.float32) + b3_ref[...]
    ).astype(o_ref.dtype)


def _round_up(n, m):
    return ((n + m - 1) // m) * m


def _choose_tile(B, tile_b):
    """Pick a batch tile (multiple of 8) that gives >= 2 grid steps when possible."""
    b8 = _round_up(B, 8)
    min_steps = 2 if b8 >= 16 else 1          # megacore sharding / pipeline overlap
    tb = min(tile_b, _round_up(pl.cdiv(b8, min_steps), 8))
    b_pad = _round_up(b8, tb)
    return tb, b_pad


def neural_forward(x, params, *, tile_b=2048):
    """3-layer MLP forward in a single Pallas kernel, gridded over batch.

    x: (B, in_features). Matches torch's `x.float()` then Linear/ReLU stack;
       matmul inputs are bf16 with f32 accumulation.
    params: w1 (in,256), b1 (1,256), w2 (256,512), b2 (1,512),
            w3 (512,out), b3 (1,out)  -- float32, weights pre-transposed so the
            kernel computes x @ W + b (== torch's x @ W.T + b).
    """
    B, in_f = x.shape
    out_f = params["w3"].shape[1]

    # torch semantics: x.float() (only costs a pass if x isn't already f32)
    if x.dtype != jnp.float32:
        x = x.astype(jnp.float32)

    # bf16 matmul inputs for the weights; biases (post-accumulation) stay f32.
    w1 = params["w1"].astype(jnp.bfloat16)
    w2 = params["w2"].astype(jnp.bfloat16)
    w3 = params["w3"].astype(jnp.bfloat16)
    b1 = params["b1"].astype(jnp.float32)
    b2 = params["b2"].astype(jnp.float32)
    b3 = params["b3"].astype(jnp.float32)

    # Batch tiling: multiple of 8, >= 2 grid steps whenever splittable.
    tb, b_pad = _choose_tile(B, tile_b)
    if b_pad != B:
        x = jnp.pad(x, ((0, b_pad - B), (0, 0)))   # tail-pad only
    grid = (b_pad // tb,)

    # Weights/biases: constant block index -> loaded once, VMEM-resident.
    def weight_spec(a):
        return pl.BlockSpec(a.shape, lambda i: (0, 0))

    flops = 2 * b_pad * (in_f * H1 + H1 * H2 + H2 * out_f)
    bytes_accessed = (
        b_pad * in_f * 4                              # x read (f32)
        + b_pad * out_f * 4                           # y write (f32, unpadded)
        + (in_f * H1 + H1 * H2 + H2 * out_f) * 2      # weights (bf16)
        + (H1 + H2 + out_f) * 4                       # biases (f32)
    )

    y = pl.pallas_call(
        _mlp_kernel,
        out_shape=jax.ShapeDtypeStruct((b_pad, out_f), jnp.float32),
        grid=grid,
        in_specs=[
            pl.BlockSpec((tb, in_f), lambda i: (i, 0)),   # x: batch-tiled
            weight_spec(w1), weight_spec(b1),
            weight_spec(w2), weight_spec(b2),
            weight_spec(w3), weight_spec(b3),
        ],
        # Unpadded, full-last-dim output block: tiny HBM writeback, no wrapper
        # lane slice needed afterwards.
        out_specs=pl.BlockSpec((tb, out_f), lambda i: (i, 0)),
        compiler_params=pltpu.CompilerParams(
            dimension_semantics=("parallel",),            # shard batch tiles across TCs
        ),
        cost_estimate=pl.CostEstimate(
            flops=flops, transcendentals=0, bytes_accessed=bytes_accessed),
    )(x, w1, b1, w2, b2, w3, b3)

    return y if b_pad == B else y[:B]


def init_params(key, in_features, out_features):
    """torch.nn.Linear-style U(-1/sqrt(fan_in), 1/sqrt(fan_in)) init.

    Weights stored as (in, out) = transpose of torch's (out, in) layout.
    """
    dims = [(in_features, H1), (H1, H2), (H2, out_features)]
    params = {}
    keys = jax.random.split(key, 2 * len(dims))
    for i, (fan_in, fan_out) in enumerate(dims):
        bound = 1.0 / jnp.sqrt(jnp.float32(fan_in))
        w = jax.random.uniform(keys[2 * i], (fan_in, fan_out),
                               minval=-bound, maxval=bound, dtype=jnp.float32)
        b = jax.random.uniform(keys[2 * i + 1], (1, fan_out),
                               minval=-bound, maxval=bound, dtype=jnp.float32)
        params[f"w{i + 1}"] = w
        params[f"b{i + 1}"] = b
    return params


if __name__ == "__main__":
    key = jax.random.PRNGKey(0)
    k_x, k_p = jax.random.split(key)

    batch = 8
    in_features = 32   # "input"  arg of Neural
    out_features = 4   # "output" arg of Neural

    x = jax.random.normal(k_x, (batch, in_features), dtype=jnp.float32)
    params = init_params(k_p, in_features, out_features)

    y = neural_forward(x, params)
    jax.block_until_ready(y)

    # Reference in plain JAX with the same bf16-input / f32-accumulate math.
    xb = x.astype(jnp.bfloat16)
    w1b = params["w1"].astype(jnp.bfloat16)
    w2b = params["w2"].astype(jnp.bfloat16)
    w3b = params["w3"].astype(jnp.bfloat16)
    ref = jnp.maximum(
        jnp.dot(xb, w1b, preferred_element_type=jnp.float32) + params["b1"], 0.0
    ).astype(jnp.bfloat16)
    ref = jnp.maximum(
        jnp.dot(ref, w2b, preferred_element_type=jnp.float32) + params["b2"], 0.0
    ).astype(jnp.bfloat16)
    ref = jnp.dot(ref, w3b, preferred_element_type=jnp.float32) + params["b3"]

    assert y.shape == (batch, out_features)
    assert jnp.allclose(y, ref, atol=1e-2, rtol=1e-2)

    # Sanity vs full-f32 math (bf16 rounding only -> loose tolerance).
    ref32 = jnp.maximum(x @ params["w1"] + params["b1"], 0.0)
    ref32 = jnp.maximum(ref32 @ params["w2"] + params["b2"], 0.0)
    ref32 = ref32 @ params["w3"] + params["b3"]
    assert jnp.allclose(y, ref32, atol=1e-1, rtol=1e-1)

    # Exercise a multi-tile grid path (>=2 steps, ragged batch) for coverage.
    x2 = jax.random.normal(k_x, (40, in_features), dtype=jnp.float32)
    y2 = neural_forward(x2, params, tile_b=16)
    jax.block_until_ready(y2)
    r2 = jnp.maximum(x2 @ params["w1"] + params["b1"], 0.0)
    r2 = jnp.maximum(r2 @ params["w2"] + params["b2"], 0.0)
    r2 = r2 @ params["w3"] + params["b3"]
    assert y2.shape == (40, out_features)
    assert jnp.allclose(y2, r2, atol=1e-1, rtol=1e-1)

    print("KERNEL_OK")
</pallas_src>

<mosaic_0001>
module attributes {stable_mosaic.version = 11 : i64} {
  func.func @_mlp_kernel(%arg0: i32, %arg1: memref<8x32xf32, #tpu.memory_space<vmem>>, %arg2: memref<32x256xbf16, #tpu.memory_space<vmem>>, %arg3: memref<1x256xf32, #tpu.memory_space<vmem>>, %arg4: memref<256x512xbf16, #tpu.memory_space<vmem>>, %arg5: memref<1x512xf32, #tpu.memory_space<vmem>>, %arg6: memref<512x4xbf16, #tpu.memory_space<vmem>>, %arg7: memref<1x4xf32, #tpu.memory_space<vmem>>, %arg8: memref<8x4xf32, #tpu.memory_space<vmem>>) attributes {dimension_semantics = [#tpu.dimension_semantics<parallel>], iteration_bounds = array<i64: 1>, scalar_prefetch = 0 : i64, scratch_operands = 0 : i64, tpu.core_type = #tpu.core_type<tc>, window_params = [{transform_indices = @transform_0, window_bounds = array<i64: 8, 32>}, {pipeline_mode = #tpu.pipeline_mode<synchronous>, transform_indices = @transform_1, window_bounds = array<i64: 32, 256>}, {pipeline_mode = #tpu.pipeline_mode<synchronous>, transform_indices = @transform_2, window_bounds = array<i64: 1, 256>}, {pipeline_mode = #tpu.pipeline_mode<synchronous>, transform_indices = @transform_3, window_bounds = array<i64: 256, 512>}, {pipeline_mode = #tpu.pipeline_mode<synchronous>, transform_indices = @transform_4, window_bounds = array<i64: 1, 512>}, {pipeline_mode = #tpu.pipeline_mode<synchronous>, transform_indices = @transform_5, window_bounds = array<i64: 512, 4>}, {pipeline_mode = #tpu.pipeline_mode<synchronous>, transform_indices = @transform_6, window_bounds = array<i64: 1, 4>}, {transform_indices = @transform_7, window_bounds = array<i64: 8, 4>}]} {
    %c0 = arith.constant 0 : index
    %c0_0 = arith.constant 0 : index
    %0 = vector.load %arg1[%c0, %c0_0] : memref<8x32xf32, #tpu.memory_space<vmem>>, vector<8x32xf32>
    %1 = arith.truncf %0 : vector<8x32xf32> to vector<8x32xbf16>
    %c0_1 = arith.constant 0 : index
    %c0_2 = arith.constant 0 : index
    %2 = vector.load %arg2[%c0_1, %c0_2] : memref<32x256xbf16, #tpu.memory_space<vmem>>, vector<32x256xbf16>
    %cst = arith.constant dense<0.000000e+00> : vector<8x256xf32>
    %3 = tpu.matmul %1, %2, %cst {dimension_numbers = #tpu.dot_dimension_numbers<[1], [0], [0], [1], [0, 0, 1, 1], [], []>} : vector<8x32xbf16>, vector<32x256xbf16>, vector<8x256xf32> -> vector<8x256xf32>
    %c0_3 = arith.constant 0 : index
    %c0_4 = arith.constant 0 : index
    %4 = vector.load %arg3[%c0_3, %c0_4] : memref<1x256xf32, #tpu.memory_space<vmem>>, vector<1x256xf32>
    %5 = vector.broadcast %4 : vector<1x256xf32> to vector<8x256xf32>
    %6 = arith.addf %3, %5 : vector<8x256xf32>
    %cst_5 = arith.constant 0.000000e+00 : f32
    %7 = vector.broadcast %cst_5 : f32 to vector<8x256xf32>
    %8 = arith.maximumf %6, %7 : vector<8x256xf32>
    %9 = arith.truncf %8 : vector<8x256xf32> to vector<8x256xbf16>
    %c0_6 = arith.constant 0 : index
    %c0_7 = arith.constant 0 : index
    %10 = vector.load %arg4[%c0_6, %c0_7] : memref<256x512xbf16, #tpu.memory_space<vmem>>, vector<256x512xbf16>
    %cst_8 = arith.constant dense<0.000000e+00> : vector<8x512xf32>
    %11 = tpu.matmul %9, %10, %cst_8 {dimension_numbers = #tpu.dot_dimension_numbers<[1], [0], [0], [1], [0, 0, 1, 1], [], []>} : vector<8x256xbf16>, vector<256x512xbf16>, vector<8x512xf32> -> vector<8x512xf32>
    %c0_9 = arith.constant 0 : index
    %c0_10 = arith.constant 0 : index
    %12 = vector.load %arg5[%c0_9, %c0_10] : memref<1x512xf32, #tpu.memory_space<vmem>>, vector<1x512xf32>
    %13 = vector.broadcast %12 : vector<1x512xf32> to vector<8x512xf32>
    %14 = arith.addf %11, %13 : vector<8x512xf32>
    %cst_11 = arith.constant 0.000000e+00 : f32
    %15 = vector.broadcast %cst_11 : f32 to vector<8x512xf32>
    %16 = arith.maximumf %14, %15 : vector<8x512xf32>
    %17 = arith.truncf %16 : vector<8x512xf32> to vector<8x512xbf16>
    %c0_12 = arith.constant 0 : index
    %c0_13 = arith.constant 0 : index
    %18 = vector.load %arg6[%c0_12, %c0_13] : memref<512x4xbf16, #tpu.memory_space<vmem>>, vector<512x4xbf16>
    %cst_14 = arith.constant dense<0.000000e+00> : vector<8x4xf32>
    %19 = tpu.matmul %17, %18, %cst_14 {dimension_numbers = #tpu.dot_dimension_numbers<[1], [0], [0], [1], [0, 0, 1, 1], [], []>} : vector<8x512xbf16>, vector<512x4xbf16>, vector<8x4xf32> -> vector<8x4xf32>
    %c0_15 = arith.constant 0 : index
    %c0_16 = arith.constant 0 : index
    %20 = vector.load %arg7[%c0_15, %c0_16] : memref<1x4xf32, #tpu.memory_space<vmem>>, vector<1x4xf32>
    %21 = vector.broadcast %20 : vector<1x4xf32> to vector<8x4xf32>
    %22 = arith.addf %19, %21 : vector<8x4xf32>
    %c0_17 = arith.constant 0 : index
    %c0_18 = arith.constant 0 : index
    %23 = vector.load %arg8[%c0_17, %c0_18] : memref<8x4xf32, #tpu.memory_space<vmem>>, vector<8x4xf32>
    tpu.vector_store %arg8[%c0_17, %c0_18], %22 {strides = array<i32>} : memref<8x4xf32, #tpu.memory_space<vmem>>, vector<8x4xf32>,
    return
  }
  func.func @transform_0(%arg0: i32) -> (i32, i32) {
    %c0_i32 = arith.constant 0 : i32
    %c0_i32_0 = arith.constant 0 : i32
    return %arg0, %c0_i32 : i32, i32
  }
  func.func @transform_1(%arg0: i32) -> (i32, i32) {
    %c0_i32 = arith.constant 0 : i32
    %c0_i32_0 = arith.constant 0 : i32
    %c0_i32_1 = arith.constant 0 : i32
    return %c0_i32, %c0_i32_0 : i32, i32
  }
  func.func @transform_2(%arg0: i32) -> (i32, i32) {
    %c0_i32 = arith.constant 0 : i32
    %c0_i32_0 = arith.constant 0 : i32
    %c0_i32_1 = arith.constant 0 : i32
    return %c0_i32, %c0_i32_0 : i32, i32
  }
  func.func @transform_3(%arg0: i32) -> (i32, i32) {
    %c0_i32 = arith.constant 0 : i32
    %c0_i32_0 = arith.constant 0 : i32
    %c0_i32_1 = arith.constant 0 : i32
    return %c0_i32, %c0_i32_0 : i32, i32
  }
  func.func @transform_4(%arg0: i32) -> (i32, i32) {
    %c0_i32 = arith.constant 0 : i32
    %c0_i32_0 = arith.constant 0 : i32
    %c0_i32_1 = arith.constant 0 : i32
    return %c0_i32, %c0_i32_0 : i32, i32
  }
  func.func @transform_5(%arg0: i32) -> (i32, i32) {
    %c0_i32 = arith.constant 0 : i32
    %c0_i32_0 = arith.constant 0 : i32
    %c0_i32_1 = arith.constant 0 : i32
    return %c0_i32, %c0_i32_0 : i32, i32
  }
  func.func @transform_6(%arg0: i32) -> (i32, i32) {
    %c0_i32 = arith.constant 0 : i32
    %c0_i32_0 = arith.constant 0 : i32
    %c0_i32_1 = arith.constant 0 : i32
    return %c0_i32, %c0_i32_0 : i32, i32
  }
  func.func @transform_7(%arg0: i32) -> (i32, i32) {
    %c0_i32 = arith.constant 0 : i32
    %c0_i32_0 = arith.constant 0 : i32
    return %arg0, %c0_i32 : i32, i32
  }
}

</mosaic_0001>

<llo_original>
// kernel: tpu_custom_call.1
$region0: #{tpu_custom_call.1}
  #allocation0 [shape = 'u32[]', space=smem, size = 0x4, offset = 0x4, fixed_abs, tag = 'smem constant byte address 0x4 - core index']
  #allocation1 [shape = 'u32[144,128]{1,0:T(1,128)}', space=vmem, size = 0x12000, scoped, tag = 'internal scratch']
  %s0 = inlined_call_operand.vmem [shape: f32[8,32], index: 0, kind: input, shape index: {}]
  %s1 = inlined_call_operand.vmem [shape: bf16[32,256], index: 1, kind: input, shape index: {}]
  %s2 = inlined_call_operand.vmem [shape: f32[1,256], index: 2, kind: input, shape index: {}]
  %s3 = inlined_call_operand.hbm [shape: bf16[256,512], index: 3, kind: input, shape index: {}]
  %s4 = inlined_call_operand.vmem [shape: f32[1,512], index: 4, kind: input, shape index: {}]
  %s5 = inlined_call_operand.vmem [shape: bf16[512,4], index: 5, kind: input, shape index: {}]
  %s6 = inlined_call_operand.vmem [shape: f32[1,4], index: 6, kind: input, shape index: {}]
  %s7 = inlined_call_operand.vmem [shape: f32[8,4], index: 7, kind: output, shape index: {}]
  %s8 = sld [smem:[#allocation0]]
  $region42: #{tpu_custom_call.1} parent=0
    _
  %s10 = ssub.s32 1, %s8
  %s11 = scalar_select 0, %s10, %s8
  $region1: #{tpu_custom_call.1} parent=0
    #allocation2 [shape = 'u8[262144]{0}', space=vmem, size = 0x40000, scoped, tag = 'input window, operand 3, single buffered']
    #allocation3 [shape = 's32[1]{0}', space=sflag, size = 0x4, scoped, tag = 'scoped memory for tpu_custom_call.1']
    %12 = vsyncpa [#allocation3], 0
    // Predicated region
    $region2: #{tpu_custom_call.1} parent=1 // pred_check
      _
    $region3: #{tpu_custom_call.1} parent=1 // pred_check_branch
      %14 = sbr.rel (0) target = $region5
    $region4: #{tpu_custom_call.1} parent=1 // pred_region
      _
    $region5: #{tpu_custom_call.1} parent=1 // pred_fallthru
      _
    // Predicated region
    $region6: #{tpu_custom_call.1} parent=1 // pred_check
      _
    $region7: #{tpu_custom_call.1} parent=1 // pred_check_branch
      %16 = sbr.rel (0) target = $region9
    $region8: #{tpu_custom_call.1} parent=1 // pred_region
      _
    $region9: #{tpu_custom_call.1} parent=1 // pred_fallthru
      _
    // Predicated region
    $region10: #{tpu_custom_call.1} parent=1 // pred_check
      _
    $region11: #{tpu_custom_call.1} parent=1 // pred_check_branch
      %18 = sbr.rel (0) target = $region13
    $region12: #{tpu_custom_call.1} parent=1 // pred_region
      _
    $region13: #{tpu_custom_call.1} parent=1 // pred_fallthru
      _
    // Predicated region
    $region14: #{tpu_custom_call.1} parent=1 // pred_check
      _
    $region15: #{tpu_custom_call.1} parent=1 // pred_check_branch
      %20 = sbr.rel (0) target = $region17
    $region16: #{tpu_custom_call.1} parent=1 // pred_region
      %s22 = ssub.s32 8192, 8192
      %23 = vsyncadd [#allocation3], %s22
      %s24 = sshll.u32 [#allocation2], 4
      %s25 = int_to_ptr.vmem [resolvable:$true] %s24
      %30 = dma.hbm_to_vmem [thread:$0]  %s3, 8192, %s25, [#allocation3], 256, 256, 16
    $region17: #{tpu_custom_call.1} parent=1 // pred_fallthru
      _
    // Predicated region
    $region18: #{tpu_custom_call.1} parent=1 // pred_check
      _
    $region19: #{tpu_custom_call.1} parent=1 // pred_check_branch
      %32 = sbr.rel (0) target = $region21
    $region20: #{tpu_custom_call.1} parent=1 // pred_region
      _
    $region21: #{tpu_custom_call.1} parent=1 // pred_fallthru
      _
    // Predicated region
    $region22: #{tpu_custom_call.1} parent=1 // pred_check
      _
    $region23: #{tpu_custom_call.1} parent=1 // pred_check_branch
      %34 = sbr.rel (0) target = $region25
    $region24: #{tpu_custom_call.1} parent=1 // pred_region
      _
    $region25: #{tpu_custom_call.1} parent=1 // pred_fallthru
      _
    // Predicated region
    $region26: #{tpu_custom_call.1} parent=1 // pred_check
      _
    $region27: #{tpu_custom_call.1} parent=1 // pred_check_branch
      %36 = sbr.rel (0) target = $region29
    $region28: #{tpu_custom_call.1} parent=1 // pred_region
      _
    $region29: #{tpu_custom_call.1} parent=1 // pred_fallthru
      _
    // Predicated region
    $region30: #{tpu_custom_call.1} parent=1 // pred_check
      _
    $region31: #{tpu_custom_call.1} parent=1 // pred_check_branch
      %38 = sbr.rel (0) target = $region33
    $region32: #{tpu_custom_call.1} parent=1 // pred_region
      %39 = dma.done [#allocation3], 8192
    $region33: #{tpu_custom_call.1} parent=1 // pred_fallthru
      _
    %v41 = vld [vmem:[%s0] sm:$0xff]
    %v42 = vpack.c.bf16 %v41, %v41
    %v43 = vld [vmem:[%s1] sm:$0xff]
    %v44 = vld [vmem:[%s1 + $0x8] sm:$0xff]
    %v45 = vld [vmem:[%s1 + $0x10] sm:$0xff]
    %v46 = vld [vmem:[%s1 + $0x18] sm:$0xff]
    %v47 = vld [vmem:[%s2] sm:$0x3]
    %v49 = vlaneseq
    %v50 = vshrl.u32 %v49, 7
    %v51 = vsub.s32 0, %v50
    %v52 = vrot.slane %v47, %v51
    %v53 = vlaneseq
    %v54 = vshrl.u32 %v53, 7
    %v55 = vsub.s32 1, %v54
    %v56 = vrot.slane %v47, %v55
    %v63 = vunpack.c.l.b16 %v43
    %v64 = vunpack.c.h.b16 %v43
    %v65 = vunpack.c.l.b16 %v44
    %v66 = vunpack.c.h.b16 %v44
    %v67 = vunpack.c.l.b16 %v45
    %v68 = vunpack.c.h.b16 %v45
    %v69 = vunpack.c.l.b16 %v46
    %v70 = vunpack.c.h.b16 %v46
    %v71 = vpack.c.b16 %v65, %v63
    %v72 = vpack.c.b16 %v66, %v64
    %v73 = vpack.c.b16 %v69, %v67
    %v74 = vpack.c.b16 %v70, %v68
    %vm79 = vcmask 261120
    %v81 = vsel %vm79, %v42, 0
    %83 = vmatprep.subr.bf16.mxu0 0
    %84 = vmatpush1.bf16.msra.mxu0 0
    %85 = vmatprep.subr.bf16.mxu0 0
    %86 = vmatpush1.bf16.msra.mxu0 0
    %87 = vmatprep.subr.bf16.mxu0 0
    %88 = vmatpush1.bf16.msra.mxu0 0
    %89 = vmatprep.subr.bf16.mxu0 0
    %90 = vmatpush1.bf16.msra.mxu0 0
    %91 = vmatprep.subr.bf16.mxu0 0
    %92 = vmatpush1.bf16.msra.mxu0 0
    %93 = vmatprep.subr.bf16.mxu0 0
    %94 = vmatpush1.bf16.msra.mxu0 0
    %95 = vmatprep.subr.bf16.mxu0 %v74
    %96 = vmatpush1.bf16.msra.mxu0 %v73
    %97 = vmatprep.subr.bf16.mxu0 %v72
    %98 = vmatpush1.bf16.msra.mxu0 %v71
    %99 = vmatprep.subr.bf16.mxu0 0
    %100 = vmatpush2.bf16.msra.mxu0 0
    %101 = vmatprep.subr.bf16.mxu0 0
    %102 = vmatpush2.bf16.msra.mxu0 0
    %103 = vmatprep.subr.bf16.mxu0 0
    %104 = vmatpush2.bf16.msra.mxu0 0
    %105 = vmatprep.subr.bf16.mxu0 0
    %106 = vmatpush2.bf16.msra.mxu0 0
    %107 = vmatprep.subr.bf16.mxu0 0
    %108 = vmatpush2.bf16.msra.mxu0 0
    %109 = vmatprep.subr.bf16.mxu0 0
    %110 = vmatpush2.bf16.msra.mxu0 0
    %111 = vmatprep.subr.bf16.mxu0 0
    %112 = vmatpush2.bf16.msra.mxu0 0
    %113 = vmatprep.subr.bf16.mxu0 0
    %114 = vmatpush2.bf16.msra.mxu0 0
    %115 = vmatprep.mubr.bf16.mxu0 0
    %116 = vmatmul.mubr.bf16.gmra.mxu0 %v81
    %v117 = vpop.f32.mrf.mxu0
    %v118 = vadd.f32 %v52, %v117
    %v119 = vpop.f32.mrf.mxu0
    %v120 = vadd.f32 %v56, %v119
    %v121 = vpop.f32.mrf.mxu0
    %v122 = vpop.f32.mrf.mxu0
    %123 = vdwg.mxu0
    %v124 = vmax.f32 %v118, 0.0
    %v125 = vmax.f32 %v120, 0.0
    %v126 = vpack.c.bf16 %v124, %v124
    %v127 = vpack.c.bf16 %v125, %v125
    %v128 = vld [vmem:[#allocation2] sm:$0xff]
    %v129 = vld [vmem:[#allocation2 + $0x8] sm:$0xff]
    %v130 = vld [vmem:[#allocation2 + $0x10] sm:$0xff]
    %v131 = vld [vmem:[#allocation2 + $0x18] sm:$0xff]
    %v132 = vld [vmem:[#allocation2 + $0x20] sm:$0xff]
    %v133 = vld [vmem:[#allocation2 + $0x28] sm:$0xff]
    %v134 = vld [vmem:[#allocation2 + $0x30] sm:$0xff]
    %v135 = vld [vmem:[#allocation2 + $0x38] sm:$0xff]
    %v136 = vld [vmem:[#allocation2 + $0x40] sm:$0xff]
    %v137 = vld [vmem:[#allocation2 + $0x48] sm:$0xff]
    %v138 = vld [vmem:[#allocation2 + $0x50] sm:$0xff]
    %v139 = vld [vmem:[#allocation2 + $0x58] sm:$0xff]
    %v140 = vld [vmem:[#allocation2 + $0x60] sm:$0xff]
    %v141 = vld [vmem:[#allocation2 + $0x68] sm:$0xff]
    %v142 = vld [vmem:[#allocation2 + $0x70] sm:$0xff]
    %v143 = vld [vmem:[#allocation2 + $0x78] sm:$0xff]
    %v144 = vld [vmem:[#allocation2 + $0x80] sm:$0xff]
    %v145 = vld [vmem:[#allocation2 + $0x88] sm:$0xff]
    %v146 = vld [vmem:[#allocation2 + $0x90] sm:$0xff]
    %v147 = vld [vmem:[#allocation2 + $0x98] sm:$0xff]
    %v148 = vld [vmem:[#allocation2 + $0xa0] sm:$0xff]
    %v149 = vld [vmem:[#allocation2 + $0xa8] sm:$0xff]
    %v150 = vld [vmem:[#allocation2 + $0xb0] sm:$0xff]
    %v151 = vld [vmem:[#allocation2 + $0xb8] sm:$0xff]
    %v152 = vld [vmem:[#allocation2 + $0xc0] sm:$0xff]
    %v153 = vld [vmem:[#allocation2 + $0xc8] sm:$0xff]
    %v154 = vld [vmem:[#allocation2 + $0xd0] sm:$0xff]
    %v155 = vld [vmem:[#allocation2 + $0xd8] sm:$0xff]
    %v156 = vld [vmem:[#allocation2 + $0xe0] sm:$0xff]
    %v157 = vld [vmem:[#allocation2 + $0xe8] sm:$0xff]
    %v158 = vld [vmem:[#allocation2 + $0xf0] sm:$0xff]
    %v159 = vld [vmem:[#allocation2 + $0xf8] sm:$0xff]
    %v160 = vld [vmem:[#allocation2 + $0x100] sm:$0xff]
    %v161 = vld [vmem:[#allocation2 + $0x108] sm:$0xff]
    %v162 = vld [vmem:[#allocation2 + $0x110] sm:$0xff]
    %v163 = vld [vmem:[#allocation2 + $0x118] sm:$0xff]
    %v164 = vld [vmem:[#allocation2 + $0x120] sm:$0xff]
    %v165 = vld [vmem:[#allocation2 + $0x128] sm:$0xff]
    %v166 = vld [vmem:[#allocation2 + $0x130] sm:$0xff]
    %v167 = vld [vmem:[#allocation2 + $0x138] sm:$0xff]
    %v168 = vld [vmem:[#allocation2 + $0x140] sm:$0xff]
    %v169 = vld [vmem:[#allocation2 + $0x148] sm:$0xff]
    %v170 = vld [vmem:[#allocation2 + $0x150] sm:$0xff]
    %v171 = vld [vmem:[#allocation2 + $0x158] sm:$0xff]
    %v172 = vld [vmem:[#allocation2 + $0x160] sm:$0xff]
    %v173 = vld [vmem:[#allocation2 + $0x168] sm:$0xff]
    %v174 = vld [vmem:[#allocation2 + $0x170] sm:$0xff]
    %v175 = vld [vmem:[#allocation2 + $0x178] sm:$0xff]
    %v176 = vld [vmem:[#allocation2 + $0x180] sm:$0xff]
    %v177 = vld [vmem:[#allocation2 + $0x188] sm:$0xff]
    %v178 = vld [vmem:[#allocation2 + $0x190] sm:$0xff]
    %v179 = vld [vmem:[#allocation2 + $0x198] sm:$0xff]
    %v180 = vld [vmem:[#allocation2 + $0x1a0] sm:$0xff]
    %v181 = vld [vmem:[#allocation2 + $0x1a8] sm:$0xff]
    %v182 = vld [vmem:[#allocation2 + $0x1b0] sm:$0xff]
    %v183 = vld [vmem:[#allocation2 + $0x1b8] sm:$0xff]
    %v184 = vld [vmem:[#allocation2 + $0x1c0] sm:$0xff]
    %v185 = vld [vmem:[#allocation2 + $0x1c8] sm:$0xff]
    %v186 = vld [vmem:[#allocation2 + $0x1d0] sm:$0xff]
    %v187 = vld [vmem:[#allocation2 + $0x1d8] sm:$0xff]
    %v188 = vld [vmem:[#allocation2 + $0x1e0] sm:$0xff]
    %v189 = vld [vmem:[#allocation2 + $0x1e8] sm:$0xff]
    %v190 = vld [vmem:[#allocation2 + $0x1f0] sm:$0xff]
    %v191 = vld [vmem:[#allocation2 + $0x1f8] sm:$0xff]
    %v192 = vld [vmem:[%s4] sm:$0xf]
    %v194 = vlaneseq
    %v195 = vshrl.u32 %v194, 7
    %v196 = vsub.s32 0, %v195
    %v197 = vrot.slane %v192, %v196
    %v198 = vlaneseq
    %v199 = vshrl.u32 %v198, 7
    %v200 = vsub.s32 1, %v199
    %v201 = vrot.slane %v192, %v200
    %v202 = vlaneseq
    %v203 = vshrl.u32 %v202, 7
    %v204 = vsub.s32 2, %v203
    %v205 = vrot.slane %v192, %v204
    %v206 = vlaneseq
    %v207 = vshrl.u32 %v206, 7
    %v208 = vsub.s32 3, %v207
    %v209 = vrot.slane %v192, %v208
    %v278 = vunpack.c.l.b16 %v128
    %v279 = vunpack.c.h.b16 %v128
    %v280 = vunpack.c.l.b16 %v129
    %v281 = vunpack.c.h.b16 %v129
    %v282 = vunpack.c.l.b16 %v130
    %v283 = vunpack.c.h.b16 %v130
    %v284 = vunpack.c.l.b16 %v131
    %v285 = vunpack.c.h.b16 %v131
    %v286 = vunpack.c.l.b16 %v132
    %v287 = vunpack.c.h.b16 %v132
    %v288 = vunpack.c.l.b16 %v133
    %v289 = vunpack.c.h.b16 %v133
    %v290 = vunpack.c.l.b16 %v134
    %v291 = vunpack.c.h.b16 %v134
    %v292 = vunpack.c.l.b16 %v135
    %v293 = vunpack.c.h.b16 %v135
    %v294 = vunpack.c.l.b16 %v136
    %v295 = vunpack.c.h.b16 %v136
    %v296 = vunpack.c.l.b16 %v137
    %v297 = vunpack.c.h.b16 %v137
    %v298 = vunpack.c.l.b16 %v138
    %v299 = vunpack.c.h.b16 %v138
    %v300 = vunpack.c.l.b16 %v139
    %v301 = vunpack.c.h.b16 %v139
    %v302 = vunpack.c.l.b16 %v140
    %v303 = vunpack.c.h.b16 %v140
    %v304 = vunpack.c.l.b16 %v141
    %v305 = vunpack.c.h.b16 %v141
    %v306 = vunpack.c.l.b16 %v142
    %v307 = vunpack.c.h.b16 %v142
    %v308 = vunpack.c.l.b16 %v143
    %v309 = vunpack.c.h.b16 %v143
    %v310 = vunpack.c.l.b16 %v144
    %v311 = vunpack.c.h.b16 %v144
    %v312 = vunpack.c.l.b16 %v145
    %v313 = vunpack.c.h.b16 %v145
    %v314 = vunpack.c.l.b16 %v146
    %v315 = vunpack.c.h.b16 %v146
    %v316 = vunpack.c.l.b16 %v147
    %v317 = vunpack.c.h.b16 %v147
    %v318 = vunpack.c.l.b16 %v148
    %v319 = vunpack.c.h.b16 %v148
    %v320 = vunpack.c.l.b16 %v149
    %v321 = vunpack.c.h.b16 %v149
    %v322 = vunpack.c.l.b16 %v150
    %v323 = vunpack.c.h.b16 %v150
    %v324 = vunpack.c.l.b16 %v151
    %v325 = vunpack.c.h.b16 %v151
    %v326 = vunpack.c.l.b16 %v152
    %v327 = vunpack.c.h.b16 %v152
    %v328 = vunpack.c.l.b16 %v153
    %v329 = vunpack.c.h.b16 %v153
    %v330 = vunpack.c.l.b16 %v154
    %v331 = vunpack.c.h.b16 %v154
    %v332 = vunpack.c.l.b16 %v155
    %v333 = vunpack.c.h.b16 %v155
    %v334 = vunpack.c.l.b16 %v156
    %v335 = vunpack.c.h.b16 %v156
    %v336 = vunpack.c.l.b16 %v157
    %v337 = vunpack.c.h.b16 %v157
    %v338 = vunpack.c.l.b16 %v158
    %v339 = vunpack.c.h.b16 %v158
    %v340 = vunpack.c.l.b16 %v159
    %v341 = vunpack.c.h.b16 %v159
    %v342 = vunpack.c.l.b16 %v160
    %v343 = vunpack.c.h.b16 %v160
    %v344 = vunpack.c.l.b16 %v161
    %v345 = vunpack.c.h.b16 %v161
    %v346 = vunpack.c.l.b16 %v162
    %v347 = vunpack.c.h.b16 %v162
    %v348 = vunpack.c.l.b16 %v163
    %v349 = vunpack.c.h.b16 %v163
    %v350 = vunpack.c.l.b16 %v164
    %v351 = vunpack.c.h.b16 %v164
    %v352 = vunpack.c.l.b16 %v165
    %v353 = vunpack.c.h.b16 %v165
    %v354 = vunpack.c.l.b16 %v166
    %v355 = vunpack.c.h.b16 %v166
    %v356 = vunpack.c.l.b16 %v167
    %v357 = vunpack.c.h.b16 %v167
    %v358 = vunpack.c.l.b16 %v168
    %v359 = vunpack.c.h.b16 %v168
    %v360 = vunpack.c.l.b16 %v169
    %v361 = vunpack.c.h.b16 %v169
    %v362 = vunpack.c.l.b16 %v170
    %v363 = vunpack.c.h.b16 %v170
    %v364 = vunpack.c.l.b16 %v171
    %v365 = vunpack.c.h.b16 %v171
    %v366 = vunpack.c.l.b16 %v172
    %v367 = vunpack.c.h.b16 %v172
    %v368 = vunpack.c.l.b16 %v173
    %v369 = vunpack.c.h.b16 %v173
    %v370 = vunpack.c.l.b16 %v174
    %v371 = vunpack.c.h.b16 %v174
    %v372 = vunpack.c.l.b16 %v175
    %v373 = vunpack.c.h.b16 %v175
    %v374 = vunpack.c.l.b16 %v176
    %v375 = vunpack.c.h.b16 %v176
    %v376 = vunpack.c.l.b16 %v177
    %v377 = vunpack.c.h.b16 %v177
    %v378 = vunpack.c.l.b16 %v178
    %v379 = vunpack.c.h.b16 %v178
    %v380 = vunpack.c.l.b16 %v179
    %v381 = vunpack.c.h.b16 %v179
    %v382 = vunpack.c.l.b16 %v180
    %v383 = vunpack.c.h.b16 %v180
    %v384 = vunpack.c.l.b16 %v181
    %v385 = vunpack.c.h.b16 %v181
    %v386 = vunpack.c.l.b16 %v182
    %v387 = vunpack.c.h.b16 %v182
    %v388 = vunpack.c.l.b16 %v183
    %v389 = vunpack.c.h.b16 %v183
    %v390 = vunpack.c.l.b16 %v184
    %v391 = vunpack.c.h.b16 %v184
    %v392 = vunpack.c.l.b16 %v185
    %v393 = vunpack.c.h.b16 %v185
    %v394 = vunpack.c.l.b16 %v186
    %v395 = vunpack.c.h.b16 %v186
    %v396 = vunpack.c.l.b16 %v187
    %v397 = vunpack.c.h.b16 %v187
    %v398 = vunpack.c.l.b16 %v188
    %v399 = vunpack.c.h.b16 %v188
    %v400 = vunpack.c.l.b16 %v189
    %v401 = vunpack.c.h.b16 %v189
    %v402 = vunpack.c.l.b16 %v190
    %v403 = vunpack.c.h.b16 %v190
    %v404 = vunpack.c.l.b16 %v191
    %v405 = vunpack.c.h.b16 %v191
    %v406 = vpack.c.b16 %v282, %v278
    %v407 = vpack.c.b16 %v283, %v279
    %v408 = vpack.c.b16 %v284, %v280
    %v409 = vpack.c.b16 %v285, %v281
    %v410 = vpack.c.b16 %v290, %v286
    %v411 = vpack.c.b16 %v291, %v287
    %v412 = vpack.c.b16 %v292, %v288
    %v413 = vpack.c.b16 %v293, %v289
    %v414 = vpack.c.b16 %v298, %v294
    %v415 = vpack.c.b16 %v299, %v295
    %v416 = vpack.c.b16 %v300, %v296
    %v417 = vpack.c.b16 %v301, %v297
    %v418 = vpack.c.b16 %v306, %v302
    %v419 = vpack.c.b16 %v307, %v303
    %v420 = vpack.c.b16 %v308, %v304
    %v421 = vpack.c.b16 %v309, %v305
    %v422 = vpack.c.b16 %v314, %v310
    %v423 = vpack.c.b16 %v315, %v311
    %v424 = vpack.c.b16 %v316, %v312
    %v425 = vpack.c.b16 %v317, %v313
    %v426 = vpack.c.b16 %v322, %v318
    %v427 = vpack.c.b16 %v323, %v319
    %v428 = vpack.c.b16 %v324, %v320
    %v429 = vpack.c.b16 %v325, %v321
    %v430 = vpack.c.b16 %v330, %v326
    %v431 = vpack.c.b16 %v331, %v327
    %v432 = vpack.c.b16 %v332, %v328
    %v433 = vpack.c.b16 %v333, %v329
    %v434 = vpack.c.b16 %v338, %v334
    %v435 = vpack.c.b16 %v339, %v335
    %v436 = vpack.c.b16 %v340, %v336
    %v437 = vpack.c.b16 %v341, %v337
    %v438 = vpack.c.b16 %v346, %v342
    %v439 = vpack.c.b16 %v347, %v343
    %v440 = vpack.c.b16 %v348, %v344
    %v441 = vpack.c.b16 %v349, %v345
    %v442 = vpack.c.b16 %v354, %v350
    %v443 = vpack.c.b16 %v355, %v351
    %v444 = vpack.c.b16 %v356, %v352
    %v445 = vpack.c.b16 %v357, %v353
    %v446 = vpack.c.b16 %v362, %v358
    %v447 = vpack.c.b16 %v363, %v359
    %v448 = vpack.c.b16 %v364, %v360
    %v449 = vpack.c.b16 %v365, %v361
    %v450 = vpack.c.b16 %v370, %v366
    %v451 = vpack.c.b16 %v371, %v367
    %v452 = vpack.c.b16 %v372, %v368
    %v453 = vpack.c.b16 %v373, %v369
    %v454 = vpack.c.b16 %v378, %v374
    %v455 = vpack.c.b16 %v379, %v375
    %v456 = vpack.c.b16 %v380, %v376
    %v457 = vpack.c.b16 %v381, %v377
    %v458 = vpack.c.b16 %v386, %v382
    %v459 = vpack.c.b16 %v387, %v383
    %v460 = vpack.c.b16 %v388, %v384
    %v461 = vpack.c.b16 %v389, %v385
    %v462 = vpack.c.b16 %v394, %v390
    %v463 = vpack.c.b16 %v395, %v391
    %v464 = vpack.c.b16 %v396, %v392
    %v465 = vpack.c.b16 %v397, %v393
    %v466 = vpack.c.b16 %v402, %v398
    %v467 = vpack.c.b16 %v403, %v399
    %v468 = vpack.c.b16 %v404, %v400
    %v469 = vpack.c.b16 %v405, %v401
    %534 = vmatprep.subr.bf16.mxu0 %v435
    %535 = vmatpush1.bf16.msra.mxu0 %v434
    %536 = vmatprep.subr.bf16.mxu0 %v431
    %537 = vmatpush1.bf16.msra.mxu0 %v430
    %538 = vmatprep.subr.bf16.mxu0 %v427
    %539 = vmatpush1.bf16.msra.mxu0 %v426
    %540 = vmatprep.subr.bf16.mxu0 %v423
    %541 = vmatpush1.bf16.msra.mxu0 %v422
    %542 = vmatprep.subr.bf16.mxu0 %v419
    %543 = vmatpush1.bf16.msra.mxu0 %v418
    %544 = vmatprep.subr.bf16.mxu0 %v415
    %545 = vmatpush1.bf16.msra.mxu0 %v414
    %546 = vmatprep.subr.bf16.mxu0 %v411
    %547 = vmatpush1.bf16.msra.mxu0 %v410
    %548 = vmatprep.subr.bf16.mxu0 %v407
    %549 = vmatpush1.bf16.msra.mxu0 %v406
    %550 = vmatprep.subr.bf16.mxu0 %v467
    %551 = vmatpush2.bf16.msra.mxu0 %v466
    %552 = vmatprep.subr.bf16.mxu0 %v463
    %553 = vmatpush2.bf16.msra.mxu0 %v462
    %554 = vmatprep.subr.bf16.mxu0 %v459
    %555 = vmatpush2.bf16.msra.mxu0 %v458
    %556 = vmatprep.subr.bf16.mxu0 %v455
    %557 = vmatpush2.bf16.msra.mxu0 %v454
    %558 = vmatprep.subr.bf16.mxu0 %v451
    %559 = vmatpush2.bf16.msra.mxu0 %v450
    %560 = vmatprep.subr.bf16.mxu0 %v447
    %561 = vmatpush2.bf16.msra.mxu0 %v446
    %562 = vmatprep.subr.bf16.mxu0 %v443
    %563 = vmatpush2.bf16.msra.mxu0 %v442
    %564 = vmatprep.subr.bf16.mxu0 %v439
    %565 = vmatpush2.bf16.msra.mxu0 %v438
    %566 = vmatprep.mubr.bf16.mxu0 %v127
    %567 = vmatmul.mubr.bf16.gmra.mxu0 %v126
    %v568 = vpop.f32.mrf.mxu0
    %v569 = vadd.f32 %v197, %v568
    %v570 = vpop.f32.mrf.mxu0
    %v571 = vadd.f32 %v201, %v570
    %v572 = vpop.f32.mrf.mxu0
    %v573 = vpop.f32.mrf.mxu0
    %574 = vdwg.mxu0
    %575 = vmatprep.subr.bf16.mxu0 %v437
    %576 = vmatpush1.bf16.msra.mxu0 %v436
    %577 = vmatprep.subr.bf16.mxu0 %v433
    %578 = vmatpush1.bf16.msra.mxu0 %v432
    %579 = vmatprep.subr.bf16.mxu0 %v429
    %580 = vmatpush1.bf16.msra.mxu0 %v428
    %581 = vmatprep.subr.bf16.mxu0 %v425
    %582 = vmatpush1.bf16.msra.mxu0 %v424
    %583 = vmatprep.subr.bf16.mxu0 %v421
    %584 = vmatpush1.bf16.msra.mxu0 %v420
    %585 = vmatprep.subr.bf16.mxu0 %v417
    %586 = vmatpush1.bf16.msra.mxu0 %v416
    %587 = vmatprep.subr.bf16.mxu0 %v413
    %588 = vmatpush1.bf16.msra.mxu0 %v412
    %589 = vmatprep.subr.bf16.mxu0 %v409
    %590 = vmatpush1.bf16.msra.mxu0 %v408
    %591 = vmatprep.subr.bf16.mxu0 %v469
    %592 = vmatpush2.bf16.msra.mxu0 %v468
    %593 = vmatprep.subr.bf16.mxu0 %v465
    %594 = vmatpush2.bf16.msra.mxu0 %v464
    %595 = vmatprep.subr.bf16.mxu0 %v461
    %596 = vmatpush2.bf16.msra.mxu0 %v460
    %597 = vmatprep.subr.bf16.mxu0 %v457
    %598 = vmatpush2.bf16.msra.mxu0 %v456
    %599 = vmatprep.subr.bf16.mxu0 %v453
    %600 = vmatpush2.bf16.msra.mxu0 %v452
    %601 = vmatprep.subr.bf16.mxu0 %v449
    %602 = vmatpush2.bf16.msra.mxu0 %v448
    %603 = vmatprep.subr.bf16.mxu0 %v445
    %604 = vmatpush2.bf16.msra.mxu0 %v444
    %605 = vmatprep.subr.bf16.mxu0 %v441
    %606 = vmatpush2.bf16.msra.mxu0 %v440
    %607 = vmatprep.mubr.bf16.mxu0 %v127
    %608 = vmatmul.mubr.bf16.gmra.mxu0 %v126
    %v609 = vpop.f32.mrf.mxu0
    %v610 = vadd.f32 %v205, %v609
    %v611 = vpop.f32.mrf.mxu0
    %v612 = vadd.f32 %v209, %v611
    %v613 = vpop.f32.mrf.mxu0
    %v614 = vpop.f32.mrf.mxu0
    %615 = vdwg.mxu0
    %v616 = vmax.f32 %v569, 0.0
    %v617 = vmax.f32 %v571, 0.0
    %v618 = vmax.f32 %v610, 0.0
    %v619 = vmax.f32 %v612, 0.0
    %v620 = vpack.c.bf16 %v616, %v616
    %v621 = vpack.c.bf16 %v617, %v617
    %v622 = vpack.c.bf16 %v618, %v618
    %v623 = vpack.c.bf16 %v619, %v619
    %v624 = vld [vmem:[%s5] sm:$0xf]
    %v625 = vld [vmem:[%s5 + $0x4] sm:$0xf]
    %v626 = vld [vmem:[%s5 + $0x8] sm:$0xf]
    %v627 = vld [vmem:[%s5 + $0xc] sm:$0xf]
    %v628 = vld [vmem:[%s5 + $0x10] sm:$0xf]
    %v629 = vld [vmem:[%s5 + $0x14] sm:$0xf]
    %v630 = vld [vmem:[%s5 + $0x18] sm:$0xf]
    %v631 = vld [vmem:[%s5 + $0x1c] sm:$0xf]
    %v632 = vld [vmem:[%s5 + $0x20] sm:$0xf]
    %v633 = vld [vmem:[%s5 + $0x24] sm:$0xf]
    %v634 = vld [vmem:[%s5 + $0x28] sm:$0xf]
    %v635 = vld [vmem:[%s5 + $0x2c] sm:$0xf]
    %v636 = vld [vmem:[%s5 + $0x30] sm:$0xf]
    %v637 = vld [vmem:[%s5 + $0x34] sm:$0xf]
    %v638 = vld [vmem:[%s5 + $0x38] sm:$0xf]
    %v639 = vld [vmem:[%s5 + $0x3c] sm:$0xf]
    %v640 = vld [vmem:[%s5 + $0x40] sm:$0xf]
    %v641 = vld [vmem:[%s5 + $0x44] sm:$0xf]
    %v642 = vld [vmem:[%s5 + $0x48] sm:$0xf]
    %v643 = vld [vmem:[%s5 + $0x4c] sm:$0xf]
    %v644 = vld [vmem:[%s5 + $0x50] sm:$0xf]
    %v645 = vld [vmem:[%s5 + $0x54] sm:$0xf]
    %v646 = vld [vmem:[%s5 + $0x58] sm:$0xf]
    %v647 = vld [vmem:[%s5 + $0x5c] sm:$0xf]
    %v648 = vld [vmem:[%s5 + $0x60] sm:$0xf]
    %v649 = vld [vmem:[%s5 + $0x64] sm:$0xf]
    %v650 = vld [vmem:[%s5 + $0x68] sm:$0xf]
    %v651 = vld [vmem:[%s5 + $0x6c] sm:$0xf]
    %v652 = vld [vmem:[%s5 + $0x70] sm:$0xf]
    %v653 = vld [vmem:[%s5 + $0x74] sm:$0xf]
    %v654 = vld [vmem:[%s5 + $0x78] sm:$0xf]
    %v655 = vld [vmem:[%s5 + $0x7c] sm:$0xf]
    %v656 = vld [vmem:[%s5 + $0x80] sm:$0xf]
    %v657 = vld [vmem:[%s5 + $0x84] sm:$0xf]
    %v658 = vld [vmem:[%s5 + $0x88] sm:$0xf]
    %v659 = vld [vmem:[%s5 + $0x8c] sm:$0xf]
    %v660 = vld [vmem:[%s5 + $0x90] sm:$0xf]
    %v661 = vld [vmem:[%s5 + $0x94] sm:$0xf]
    %v662 = vld [vmem:[%s5 + $0x98] sm:$0xf]
    %v663 = vld [vmem:[%s5 + $0x9c] sm:$0xf]
    %v664 = vld [vmem:[%s5 + $0xa0] sm:$0xf]
    %v665 = vld [vmem:[%s5 + $0xa4] sm:$0xf]
    %v666 = vld [vmem:[%s5 + $0xa8] sm:$0xf]
    %v667 = vld [vmem:[%s5 + $0xac] sm:$0xf]
    %v668 = vld [vmem:[%s5 + $0xb0] sm:$0xf]
    %v669 = vld [vmem:[%s5 + $0xb4] sm:$0xf]
    %v670 = vld [vmem:[%s5 + $0xb8] sm:$0xf]
    %v671 = vld [vmem:[%s5 + $0xbc] sm:$0xf]
    %v672 = vld [vmem:[%s5 + $0xc0] sm:$0xf]
    %v673 = vld [vmem:[%s5 + $0xc4] sm:$0xf]
    %v674 = vld [vmem:[%s5 + $0xc8] sm:$0xf]
    %v675 = vld [vmem:[%s5 + $0xcc] sm:$0xf]
    %v676 = vld [vmem:[%s5 + $0xd0] sm:$0xf]
    %v677 = vld [vmem:[%s5 + $0xd4] sm:$0xf]
    %v678 = vld [vmem:[%s5 + $0xd8] sm:$0xf]
    %v679 = vld [vmem:[%s5 + $0xdc] sm:$0xf]
    %v680 = vld [vmem:[%s5 + $0xe0] sm:$0xf]
    %v681 = vld [vmem:[%s5 + $0xe4] sm:$0xf]
    %v682 = vld [vmem:[%s5 + $0xe8] sm:$0xf]
    %v683 = vld [vmem:[%s5 + $0xec] sm:$0xf]
    %v684 = vld [vmem:[%s5 + $0xf0] sm:$0xf]
    %v685 = vld [vmem:[%s5 + $0xf4] sm:$0xf]
    %v686 = vld [vmem:[%s5 + $0xf8] sm:$0xf]
    %v687 = vld [vmem:[%s5 + $0xfc] sm:$0xf]
    %v688 = vld [vmem:[%s6] sm:$0x1]
    %v690 = vlaneseq
    %v691 = vshrl.u32 %v690, 7
    %v692 = vsub.s32 0, %v691
    %v693 = vrot.slane %v688, %v692
    %v759 = vunpack.c.l.b16 %v624
    %v760 = vunpack.c.l.b16 %v625
    %v761 = vunpack.c.l.b16 %v626
    %v762 = vunpack.c.l.b16 %v627
    %v763 = vunpack.c.l.b16 %v628
    %v764 = vunpack.c.l.b16 %v629
    %v765 = vunpack.c.l.b16 %v630
    %v766 = vunpack.c.l.b16 %v631
    %v767 = vunpack.c.l.b16 %v632
    %v768 = vunpack.c.l.b16 %v633
    %v769 = vunpack.c.l.b16 %v634
    %v770 = vunpack.c.l.b16 %v635
    %v771 = vunpack.c.l.b16 %v636
    %v772 = vunpack.c.l.b16 %v637
    %v773 = vunpack.c.l.b16 %v638
    %v774 = vunpack.c.l.b16 %v639
    %v775 = vunpack.c.l.b16 %v640
    %v776 = vunpack.c.l.b16 %v641
    %v777 = vunpack.c.l.b16 %v642
    %v778 = vunpack.c.l.b16 %v643
    %v779 = vunpack.c.l.b16 %v644
    %v780 = vunpack.c.l.b16 %v645
    %v781 = vunpack.c.l.b16 %v646
    %v782 = vunpack.c.l.b16 %v647
    %v783 = vunpack.c.l.b16 %v648
    %v784 = vunpack.c.l.b16 %v649
    %v785 = vunpack.c.l.b16 %v650
    %v786 = vunpack.c.l.b16 %v651
    %v787 = vunpack.c.l.b16 %v652
    %v788 = vunpack.c.l.b16 %v653
    %v789 = vunpack.c.l.b16 %v654
    %v790 = vunpack.c.l.b16 %v655
    %v791 = vunpack.c.l.b16 %v656
    %v792 = vunpack.c.l.b16 %v657
    %v793 = vunpack.c.l.b16 %v658
    %v794 = vunpack.c.l.b16 %v659
    %v795 = vunpack.c.l.b16 %v660
    %v796 = vunpack.c.l.b16 %v661
    %v797 = vunpack.c.l.b16 %v662
    %v798 = vunpack.c.l.b16 %v663
    %v799 = vunpack.c.l.b16 %v664
    %v800 = vunpack.c.l.b16 %v665
    %v801 = vunpack.c.l.b16 %v666
    %v802 = vunpack.c.l.b16 %v667
    %v803 = vunpack.c.l.b16 %v668
    %v804 = vunpack.c.l.b16 %v669
    %v805 = vunpack.c.l.b16 %v670
    %v806 = vunpack.c.l.b16 %v671
    %v807 = vunpack.c.l.b16 %v672
    %v808 = vunpack.c.l.b16 %v673
    %v809 = vunpack.c.l.b16 %v674
    %v810 = vunpack.c.l.b16 %v675
    %v811 = vunpack.c.l.b16 %v676
    %v812 = vunpack.c.l.b16 %v677
    %v813 = vunpack.c.l.b16 %v678
    %v814 = vunpack.c.l.b16 %v679
    %v815 = vunpack.c.l.b16 %v680
    %v816 = vunpack.c.l.b16 %v681
    %v817 = vunpack.c.l.b16 %v682
    %v818 = vunpack.c.l.b16 %v683
    %v819 = vunpack.c.l.b16 %v684
    %v820 = vunpack.c.l.b16 %v685
    %v821 = vunpack.c.l.b16 %v686
    %v822 = vunpack.c.l.b16 %v687
    %v823 = vpack.c.b16 %v760, %v759
    %v824 = vpack.c.b16 %v762, %v761
    %v825 = vpack.c.b16 %v764, %v763
    %v826 = vpack.c.b16 %v766, %v765
    %v827 = vpack.c.b16 %v768, %v767
    %v828 = vpack.c.b16 %v770, %v769
    %v829 = vpack.c.b16 %v772, %v771
    %v830 = vpack.c.b16 %v774, %v773
    %v831 = vpack.c.b16 %v776, %v775
    %v832 = vpack.c.b16 %v778, %v777
    %v833 = vpack.c.b16 %v780, %v779
    %v834 = vpack.c.b16 %v782, %v781
    %v835 = vpack.c.b16 %v784, %v783
    %v836 = vpack.c.b16 %v786, %v785
    %v837 = vpack.c.b16 %v788, %v787
    %v838 = vpack.c.b16 %v790, %v789
    %v839 = vpack.c.b16 %v792, %v791
    %v840 = vpack.c.b16 %v794, %v793
    %v841 = vpack.c.b16 %v796, %v795
    %v842 = vpack.c.b16 %v798, %v797
    %v843 = vpack.c.b16 %v800, %v799
    %v844 = vpack.c.b16 %v802, %v801
    %v845 = vpack.c.b16 %v804, %v803
    %v846 = vpack.c.b16 %v806, %v805
    %v847 = vpack.c.b16 %v808, %v807
    %v848 = vpack.c.b16 %v810, %v809
    %v849 = vpack.c.b16 %v812, %v811
    %v850 = vpack.c.b16 %v814, %v813
    %v851 = vpack.c.b16 %v816, %v815
    %v852 = vpack.c.b16 %v818, %v817
    %v853 = vpack.c.b16 %v820, %v819
    %v854 = vpack.c.b16 %v822, %v821
    %887 = vmatprep.subr.bf16.mxu0 0
    %888 = vmatpush1.bf16.msra.mxu0 %v830
    %889 = vmatprep.subr.bf16.mxu0 0
    %890 = vmatpush1.bf16.msra.mxu0 %v829
    %891 = vmatprep.subr.bf16.mxu0 0
    %892 = vmatpush1.bf16.msra.mxu0 %v828
    %893 = vmatprep.subr.bf16.mxu0 0
    %894 = vmatpush1.bf16.msra.mxu0 %v827
    %895 = vmatprep.subr.bf16.mxu0 0
    %896 = vmatpush1.bf16.msra.mxu0 %v826
    %897 = vmatprep.subr.bf16.mxu0 0
    %898 = vmatpush1.bf16.msra.mxu0 %v825
    %899 = vmatprep.subr.bf16.mxu0 0
    %900 = vmatpush1.bf16.msra.mxu0 %v824
    %901 = vmatprep.subr.bf16.mxu0 0
    %902 = vmatpush1.bf16.msra.mxu0 %v823
    %903 = vmatprep.subr.bf16.mxu0 0
    %904 = vmatpush2.bf16.msra.mxu0 %v838
    %905 = vmatprep.subr.bf16.mxu0 0
    %906 = vmatpush2.bf16.msra.mxu0 %v837
    %907 = vmatprep.subr.bf16.mxu0 0
    %908 = vmatpush2.bf16.msra.mxu0 %v836
    %909 = vmatprep.subr.bf16.mxu0 0
    %910 = vmatpush2.bf16.msra.mxu0 %v835
    %911 = vmatprep.subr.bf16.mxu0 0
    %912 = vmatpush2.bf16.msra.mxu0 %v834
    %913 = vmatprep.subr.bf16.mxu0 0
    %914 = vmatpush2.bf16.msra.mxu0 %v833
    %915 = vmatprep.subr.bf16.mxu0 0
    %916 = vmatpush2.bf16.msra.mxu0 %v832
    %917 = vmatprep.subr.bf16.mxu0 0
    %918 = vmatpush2.bf16.msra.mxu0 %v831
    %919 = vmatprep.mubr.bf16.mxu0 %v621
    %920 = vmatmul.mubr.bf16.gmra.mxu0 %v620
    %v921 = vpop.f32.mrf.mxu0
    %v922 = vadd.f32 %v693, %v921
    %v923 = vpop.f32.mrf.mxu0
    %v924 = vpop.f32.mrf.mxu0
    %v925 = vpop.f32.mrf.mxu0
    %926 = vdwg.mxu0
    %927 = vmatprep.subr.bf16.mxu0 0
    %928 = vmatpush1.bf16.msra.mxu0 %v846
    %929 = vmatprep.subr.bf16.mxu0 0
    %930 = vmatpush1.bf16.msra.mxu0 %v845
    %931 = vmatprep.subr.bf16.mxu0 0
    %932 = vmatpush1.bf16.msra.mxu0 %v844
    %933 = vmatprep.subr.bf16.mxu0 0
    %934 = vmatpush1.bf16.msra.mxu0 %v843
    %935 = vmatprep.subr.bf16.mxu0 0
    %936 = vmatpush1.bf16.msra.mxu0 %v842
    %937 = vmatprep.subr.bf16.mxu0 0
    %938 = vmatpush1.bf16.msra.mxu0 %v841
    %939 = vmatprep.subr.bf16.mxu0 0
    %940 = vmatpush1.bf16.msra.mxu0 %v840
    %941 = vmatprep.subr.bf16.mxu0 0
    %942 = vmatpush1.bf16.msra.mxu0 %v839
    %943 = vmatprep.subr.bf16.mxu0 0
    %944 = vmatpush2.bf16.msra.mxu0 %v854
    %945 = vmatprep.subr.bf16.mxu0 0
    %946 = vmatpush2.bf16.msra.mxu0 %v853
    %947 = vmatprep.subr.bf16.mxu0 0
    %948 = vmatpush2.bf16.msra.mxu0 %v852
    %949 = vmatprep.subr.bf16.mxu0 0
    %950 = vmatpush2.bf16.msra.mxu0 %v851
    %951 = vmatprep.subr.bf16.mxu0 0
    %952 = vmatpush2.bf16.msra.mxu0 %v850
    %953 = vmatprep.subr.bf16.mxu0 0
    %954 = vmatpush2.bf16.msra.mxu0 %v849
    %955 = vmatprep.subr.bf16.mxu0 0
    %956 = vmatpush2.bf16.msra.mxu0 %v848
    %957 = vmatprep.subr.bf16.mxu0 0
    %958 = vmatpush2.bf16.msra.mxu0 %v847
    %959 = vmatprep.mubr.bf16.mxu0 %v623
    %960 = vmatmul.mubr.bf16.gmra.mxu0 %v622
    %v961 = vpop.f32.mrf.mxu0
    %v962 = vadd.f32 %v922, %v961
    %v963 = vpop.f32.mrf.mxu0
    %v964 = vpop.f32.mrf.mxu0
    %v965 = vpop.f32.mrf.mxu0
    %966 = vdwg.mxu0
    %vm967 = vcmask 31744
    %968 = vst.msk [vmem:[%s7] sm:$0xff] %vm967, %v962
    // Predicated region
    $region34: #{tpu_custom_call.1} parent=1 // pred_check
      _
    $region35: #{tpu_custom_call.1} parent=1 // pred_check_branch
      %970 = sbr.rel (0) target = $region37
    $region36: #{tpu_custom_call.1} parent=1 // pred_region
      _
    $region37: #{tpu_custom_call.1} parent=1 // pred_fallthru
      _
    // Predicated region
    $region38: #{tpu_custom_call.1} parent=1 // pred_check
      _
    $region39: #{tpu_custom_call.1} parent=1 // pred_check_branch
      %972 = sbr.rel (0) target = $region41
    $region40: #{tpu_custom_call.1} parent=1 // pred_region
      _
    $region41: #{tpu_custom_call.1} parent=1 // pred_fallthru
      _
    %973 = vsyncpa [#allocation3], 1

</llo_original>
